<compile_context>
chip_gen: v7x
topology: tpu7x:2x2x1
jax: 0.10.0
libtpu: 0.0.40
codegen_flags: <defaults>
</compile_context>

<pallas_src>
import functools

import jax
import jax.numpy as jnp
import numpy as np
from jax.experimental import pallas as pl
from jax.experimental.pallas import tpu as pltpu


def _round_up(x, m):
    return -(-x // m) * m


def _vmem_spec():
    # Whole (small) array resident in VMEM, no tiling.
    return pl.BlockSpec(memory_space=pltpu.MemorySpace.VMEM)


# ---------------------------------------------------------------------------
# Fused kernel: all TemporalBlocks + MLP head in one pallas_call
# ---------------------------------------------------------------------------

def _causal_conv_relu(x, wf_ref, b_ref, dilation, ksize, batch):
    """Causal dilated conv1d + bias + ReLU via one im2col MXU matmul.

    x      : (Cin_p, N) float32, time-major / batch-minor lanes (col = l*B + b)
    wf_ref : (Cout_p, K*Cin_p) bfloat16, tap-major columns (col = k*Cin_p + c)
    b_ref  : (Cout_p, 1) float32
    returns (Cout_p, N) float32
    """
    cin, n = x.shape
    if ksize == 1:
        xk = x.astype(jnp.bfloat16)
    else:
        # Max causal shift for this conv; because batch is the minor axis of
        # the flattened lane dim, a uniform column shift never bleeds data
        # across batch boundaries.
        pad = (ksize - 1) * dilation * batch
        pref = _round_up(pad, 128)                       # lane-ALIGNED zero prefix
        xp = jnp.concatenate([jnp.zeros((cin, pref), x.dtype), x], axis=1)
        taps = []
        for k in range(ksize):                           # static, tiny K
            shift = (ksize - 1 - k) * dilation * batch   # cols to shift right
            taps.append(xp[:, pref - shift: pref - shift + n])
        # Sublane-aligned stack (Cin_p multiple of 8): the im2col operand.
        xk = jnp.concatenate(taps, axis=0).astype(jnp.bfloat16)   # (K*Cin_p, N)
    y = jnp.dot(wf_ref[...], xk, preferred_element_type=jnp.float32)
    return jnp.maximum(y + b_ref[...], 0.0)


def tcn_fused_kernel(*refs, block_meta, ksize, batch, length):
    """All TemporalBlocks back-to-back + fused MLP head, entirely in VMEM.

    refs = (x, <per-block params...>, w1h, b1h, w2h, b2h, out)
    per-block params: w1 (Cout_p, K*Cin_p) bf16, b1 (Cout_p,1) f32,
                      w2 (Cout_p, K*Cout_p) bf16, b2 (Cout_p,1) f32,
                      [wd (Cout_p, Cin_p) bf16, bd (Cout_p,1) f32]  (if Cin!=Cout)
    """
    x_ref, out_ref = refs[0], refs[-1]
    p = refs[1:-1]

    x = x_ref[...]                                       # (C0_p, N_pad) f32
    i = 0
    for has_down, dilation in block_meta:
        w1, b1, w2, b2 = p[i], p[i + 1], p[i + 2], p[i + 3]
        i += 4
        h = _causal_conv_relu(x, w1, b1, dilation, ksize, batch)
        h = _causal_conv_relu(h, w2, b2, dilation, ksize, batch)
        if has_down:
            wd, bd = p[i], p[i + 1]
            i += 2
            res = jnp.dot(wd[...], x.astype(jnp.bfloat16),
                          preferred_element_type=jnp.float32) + bd[...]
        else:
            res = x
        x = jnp.maximum(h + res, 0.0)

    # ---- fused MLP head --------------------------------------------------
    w1h, b1h, w2h, b2h = p[i], p[i + 1], p[i + 2], p[i + 3]
    # stacked[l*C_p + c, b] == x[c, l*B + b] == torch-flatten(1) element (b, c*L+l);
    # W1 was pre-permuted in the wrapper to exactly this row order.  Only valid
    # (non lane-padded) time columns l < L are gathered.
    stacked = jnp.concatenate(
        [x[:, l * batch:(l + 1) * batch] for l in range(length)], axis=0)
    h1 = jnp.dot(w1h[...], stacked.astype(jnp.bfloat16),
                 preferred_element_type=jnp.float32) + b1h[...]
    h1 = jnp.maximum(h1, 0.0)
    out = jnp.dot(w2h[...], h1.astype(jnp.bfloat16),
                  preferred_element_type=jnp.float32) + b2h[...]
    out_ref[...] = out.astype(out_ref.dtype)


# ---------------------------------------------------------------------------
# Wrapper: layout plumbing + parameter packing (all outside the kernel)
# ---------------------------------------------------------------------------

def _conv_w(w, cout_p, cin_p):
    """(Cout, Cin, K) torch conv weight -> (Cout_p, K*Cin_p) bf16, tap-major cols."""
    cout, cin, k = w.shape
    w = jnp.pad(w, ((0, cout_p - cout), (0, cin_p - cin), (0, 0)))
    return jnp.transpose(w, (0, 2, 1)).reshape(cout_p, k * cin_p).astype(jnp.bfloat16)


def _pad_bias(b, c_p):
    return jnp.pad(b.reshape(-1, 1), ((0, c_p - b.shape[0]), (0, 0)))


def tcn_forward(x, params):
    B, C0, L = x.shape
    ksize = params["blocks"][0]["w1"].shape[2]
    n = L * B
    n_pad = _round_up(n, 128)                 # lane-dense time*batch axis
    c0_p = _round_up(C0, 8)

    # Lane-dense, time-major / batch-minor layout: x2[c, l*B + b] = x[b, c, l].
    x2 = jnp.transpose(x, (1, 2, 0)).reshape(C0, n)
    x2 = jnp.pad(x2, ((0, c0_p - C0), (0, n_pad - n)))

    flat_params = []
    block_meta = []
    in_ch = C0
    for i, bp in enumerate(params["blocks"]):
        out_ch = bp["w1"].shape[0]
        cin_p, cout_p = _round_up(in_ch, 8), _round_up(out_ch, 8)
        flat_params += [_conv_w(bp["w1"], cout_p, cin_p), _pad_bias(bp["b1"], cout_p),
                        _conv_w(bp["w2"], cout_p, cout_p), _pad_bias(bp["b2"], cout_p)]
        has_down = "wd" in bp
        if has_down:
            wd = jnp.pad(bp["wd"], ((0, cout_p - out_ch), (0, cin_p - in_ch)))
            flat_params += [wd.astype(jnp.bfloat16), _pad_bias(bp["bd"], cout_p)]
        block_meta.append((has_down, 2 ** i))
        in_ch = out_ch

    c_last = in_ch
    c_last_p = _round_up(c_last, 8)
    hid = params["lin1_w"].shape[1]
    out_size = params["lin2_w"].shape[1]
    out_rows = _round_up(out_size, 8)

    # W1 (C_last*L, hid) with row index c*L + l  ->  (hid, L*C_last_p) with
    # column index l*C_last_p + c, matching the in-kernel `stacked` layout.
    w1h = params["lin1_w"].reshape(c_last, L, hid)
    w1h = jnp.pad(w1h, ((0, c_last_p - c_last), (0, 0), (0, 0)))
    w1h = jnp.transpose(w1h, (1, 0, 2)).reshape(L * c_last_p, hid).T
    b1h = params["lin1_b"].reshape(-1, 1)
    w2h = jnp.pad(params["lin2_w"].T, ((0, out_rows - out_size), (0, 0)))
    b2h = jnp.pad(params["lin2_b"].reshape(-1, 1), ((0, out_rows - out_size), (0, 0)))
    head_params = [w1h.astype(jnp.bfloat16), b1h,
                   w2h.astype(jnp.bfloat16), b2h]

    kernel = functools.partial(tcn_fused_kernel, block_meta=tuple(block_meta),
                               ksize=ksize, batch=B, length=L)

    # TODO(synk): at production sizes (C*L*B*4B approaching the scoped VMEM
    # limit, esp. v7x's 64 MiB) the blocks must be tiled with a time-axis grid
    # carrying a (receptive_field-1)*B causal lane halo (marked "parallel" for
    # v7x megacore) and the head run as a separate reduction kernel; at these
    # sizes everything fits in a single VMEM-resident call.
    out = pl.pallas_call(
        kernel,
        out_shape=jax.ShapeDtypeStruct((out_rows, B), jnp.float32),
        in_specs=[_vmem_spec()] * (1 + len(flat_params) + len(head_params)),
        out_specs=_vmem_spec(),
        compiler_params=pltpu.CompilerParams(vmem_limit_bytes=48 * 1024 * 1024),
    )(x2, *flat_params, *head_params)
    return out[:out_size, :].T                           # (B, out_size)


# ---------------------------------------------------------------------------
# Pure-JAX f32 reference (correctness check)
# ---------------------------------------------------------------------------

def _ref_causal_conv(x, w, b, dilation):
    pad = (w.shape[2] - 1) * dilation
    y = jax.lax.conv_general_dilated(
        x, w, window_strides=(1,), padding=[(pad, 0)],
        rhs_dilation=(dilation,), dimension_numbers=("NCH", "OIH", "NCH"))
    return y + b[None, :, None]


def ref_forward(x, params):
    for i, bp in enumerate(params["blocks"]):
        h = jax.nn.relu(_ref_causal_conv(x, bp["w1"], bp["b1"], 2 ** i))
        h = jax.nn.relu(_ref_causal_conv(h, bp["w2"], bp["b2"], 2 ** i))
        if "wd" in bp:
            res = jnp.einsum("oi,bil->bol", bp["wd"], x) + bp["bd"][None, :, None]
        else:
            res = x
        x = jax.nn.relu(h + res)
    flat = x.reshape(x.shape[0], -1)
    h = jax.nn.relu(flat @ params["lin1_w"] + params["lin1_b"])
    return h @ params["lin2_w"] + params["lin2_b"]


# ---------------------------------------------------------------------------
# Deterministic parameter init (effective weights; weight_norm folded in)
# ---------------------------------------------------------------------------

def init_params(key, input_size, num_channels, kernel_size, output_size,
                length_mc):
    keys = iter(jax.random.split(key, 4 * len(num_channels) * 2 + 8))
    blocks = []
    in_ch = input_size
    for out_ch in num_channels:
        bp = {
            "w1": 0.2 * jax.random.normal(next(keys), (out_ch, in_ch, kernel_size), jnp.float32),
            "b1": 0.1 * jax.random.normal(next(keys), (out_ch,), jnp.float32),
            "w2": 0.2 * jax.random.normal(next(keys), (out_ch, out_ch, kernel_size), jnp.float32),
            "b2": 0.1 * jax.random.normal(next(keys), (out_ch,), jnp.float32),
        }
        if in_ch != out_ch:
            bp["wd"] = 0.2 * jax.random.normal(next(keys), (out_ch, in_ch), jnp.float32)
            bp["bd"] = 0.1 * jax.random.normal(next(keys), (out_ch,), jnp.float32)
        blocks.append(bp)
        in_ch = out_ch
    feat = num_channels[-1] * length_mc
    return {
        "blocks": blocks,
        "lin1_w": 0.1 * jax.random.normal(next(keys), (feat, 64), jnp.float32),
        "lin1_b": 0.1 * jax.random.normal(next(keys), (64,), jnp.float32),
        "lin2_w": 0.1 * jax.random.normal(next(keys), (64, output_size), jnp.float32),
        "lin2_b": 0.1 * jax.random.normal(next(keys), (output_size,), jnp.float32),
    }


# ---------------------------------------------------------------------------

if __name__ == "__main__":
    # Small, self-consistent config:
    #   input_size=4, num_channels=[8, 16], kernel_size=3, dropout=0 (eval),
    #   length_MC = L = 8, output_size=5, batch=2.
    batch, input_size, length_mc = 2, 4, 8
    num_channels = [8, 16]
    kernel_size = 3
    output_size = 5

    key = jax.random.PRNGKey(0)
    kx, kp = jax.random.split(key)
    x = jax.random.normal(kx, (batch, input_size, length_mc), jnp.float32)
    params = init_params(kp, input_size, num_channels, kernel_size,
                         output_size, length_mc)

    out = jax.block_until_ready(tcn_forward(x, params))
    ref = jax.block_until_ready(ref_forward(x, params))

    # Tolerance loosened for bf16 MXU inputs (f32 accumulation).
    np.testing.assert_allclose(np.asarray(out), np.asarray(ref),
                               rtol=5e-2, atol=5e-2)
    assert out.shape == (batch, output_size)
    print("KERNEL_OK")
</pallas_src>

<mosaic_0001>
module attributes {stable_mosaic.version = 11 : i64} {
  func.func @tcn_fused_kernel(%arg0: memref<8x128xf32, #tpu.memory_space<vmem>>, %arg1: memref<8x24xbf16, #tpu.memory_space<vmem>>, %arg2: memref<8x1xf32, #tpu.memory_space<vmem>>, %arg3: memref<8x24xbf16, #tpu.memory_space<vmem>>, %arg4: memref<8x1xf32, #tpu.memory_space<vmem>>, %arg5: memref<8x8xbf16, #tpu.memory_space<vmem>>, %arg6: memref<8x1xf32, #tpu.memory_space<vmem>>, %arg7: memref<16x24xbf16, #tpu.memory_space<vmem>>, %arg8: memref<16x1xf32, #tpu.memory_space<vmem>>, %arg9: memref<16x48xbf16, #tpu.memory_space<vmem>>, %arg10: memref<16x1xf32, #tpu.memory_space<vmem>>, %arg11: memref<16x8xbf16, #tpu.memory_space<vmem>>, %arg12: memref<16x1xf32, #tpu.memory_space<vmem>>, %arg13: memref<64x128xbf16, #tpu.memory_space<vmem>>, %arg14: memref<64x1xf32, #tpu.memory_space<vmem>>, %arg15: memref<8x64xbf16, #tpu.memory_space<vmem>>, %arg16: memref<8x1xf32, #tpu.memory_space<vmem>>, %arg17: memref<8x2xf32, #tpu.memory_space<vmem>>) attributes {dimension_semantics = [], scalar_prefetch = 0 : i64, scratch_operands = 0 : i64, tpu.core_type = #tpu.core_type<tc>} {
    %c0 = arith.constant 0 : index
    %c0_0 = arith.constant 0 : index
    %0 = vector.load %arg0[%c0, %c0_0] : memref<8x128xf32, #tpu.memory_space<vmem>>, vector<8x128xf32>
    %cst = arith.constant 0.000000e+00 : f32
    %1 = vector.broadcast %cst : f32 to vector<8x128xf32>
    %2 = tpu.concatenate %1, %0 in 1 : vector<8x128xf32>, vector<8x128xf32> -> vector<8x256xf32>
    %3 = vector.extract_strided_slice %2 {offsets = [0, 124], sizes = [8, 128], strides = [1, 1]} : vector<8x256xf32> to vector<8x128xf32>
    %4 = vector.extract_strided_slice %2 {offsets = [0, 126], sizes = [8, 128], strides = [1, 1]} : vector<8x256xf32> to vector<8x128xf32>
    %5 = vector.extract_strided_slice %2 {offsets = [0, 128], sizes = [8, 128], strides = [1, 1]} : vector<8x256xf32> to vector<8x128xf32>
    %6 = tpu.concatenate %3, %4, %5 in 0 : vector<8x128xf32>, vector<8x128xf32>, vector<8x128xf32> -> vector<24x128xf32>
    %7 = arith.truncf %6 : vector<24x128xf32> to vector<24x128xbf16>
    %c0_1 = arith.constant 0 : index
    %c0_2 = arith.constant 0 : index
    %8 = vector.load %arg1[%c0_1, %c0_2] : memref<8x24xbf16, #tpu.memory_space<vmem>>, vector<8x24xbf16>
    %cst_3 = arith.constant dense<0.000000e+00> : vector<8x128xf32>
    %9 = tpu.matmul %8, %7, %cst_3 {dimension_numbers = #tpu.dot_dimension_numbers<[1], [0], [0], [1], [0, 0, 1, 1], [], []>} : vector<8x24xbf16>, vector<24x128xbf16>, vector<8x128xf32> -> vector<8x128xf32>
    %c0_4 = arith.constant 0 : index
    %c0_5 = arith.constant 0 : index
    %10 = vector.load %arg2[%c0_4, %c0_5] : memref<8x1xf32, #tpu.memory_space<vmem>>, vector<8x1xf32>
    %11 = vector.broadcast %10 : vector<8x1xf32> to vector<8x128xf32>
    %12 = arith.addf %9, %11 : vector<8x128xf32>
    %cst_6 = arith.constant 0.000000e+00 : f32
    %13 = vector.broadcast %cst_6 : f32 to vector<8x128xf32>
    %14 = arith.maximumf %12, %13 : vector<8x128xf32>
    %cst_7 = arith.constant 0.000000e+00 : f32
    %15 = vector.broadcast %cst_7 : f32 to vector<8x128xf32>
    %16 = tpu.concatenate %15, %14 in 1 : vector<8x128xf32>, vector<8x128xf32> -> vector<8x256xf32>
    %17 = vector.extract_strided_slice %16 {offsets = [0, 124], sizes = [8, 128], strides = [1, 1]} : vector<8x256xf32> to vector<8x128xf32>
    %18 = vector.extract_strided_slice %16 {offsets = [0, 126], sizes = [8, 128], strides = [1, 1]} : vector<8x256xf32> to vector<8x128xf32>
    %19 = vector.extract_strided_slice %16 {offsets = [0, 128], sizes = [8, 128], strides = [1, 1]} : vector<8x256xf32> to vector<8x128xf32>
    %20 = tpu.concatenate %17, %18, %19 in 0 : vector<8x128xf32>, vector<8x128xf32>, vector<8x128xf32> -> vector<24x128xf32>
    %21 = arith.truncf %20 : vector<24x128xf32> to vector<24x128xbf16>
    %c0_8 = arith.constant 0 : index
    %c0_9 = arith.constant 0 : index
    %22 = vector.load %arg3[%c0_8, %c0_9] : memref<8x24xbf16, #tpu.memory_space<vmem>>, vector<8x24xbf16>
    %cst_10 = arith.constant dense<0.000000e+00> : vector<8x128xf32>
    %23 = tpu.matmul %22, %21, %cst_10 {dimension_numbers = #tpu.dot_dimension_numbers<[1], [0], [0], [1], [0, 0, 1, 1], [], []>} : vector<8x24xbf16>, vector<24x128xbf16>, vector<8x128xf32> -> vector<8x128xf32>
    %c0_11 = arith.constant 0 : index
    %c0_12 = arith.constant 0 : index
    %24 = vector.load %arg4[%c0_11, %c0_12] : memref<8x1xf32, #tpu.memory_space<vmem>>, vector<8x1xf32>
    %25 = vector.broadcast %24 : vector<8x1xf32> to vector<8x128xf32>
    %26 = arith.addf %23, %25 : vector<8x128xf32>
    %cst_13 = arith.constant 0.000000e+00 : f32
    %27 = vector.broadcast %cst_13 : f32 to vector<8x128xf32>
    %28 = arith.maximumf %26, %27 : vector<8x128xf32>
    %c0_14 = arith.constant 0 : index
    %c0_15 = arith.constant 0 : index
    %29 = vector.load %arg5[%c0_14, %c0_15] : memref<8x8xbf16, #tpu.memory_space<vmem>>, vector<8x8xbf16>
    %30 = arith.truncf %0 : vector<8x128xf32> to vector<8x128xbf16>
    %cst_16 = arith.constant dense<0.000000e+00> : vector<8x128xf32>
    %31 = tpu.matmul %29, %30, %cst_16 {dimension_numbers = #tpu.dot_dimension_numbers<[1], [0], [0], [1], [0, 0, 1, 1], [], []>} : vector<8x8xbf16>, vector<8x128xbf16>, vector<8x128xf32> -> vector<8x128xf32>
    %c0_17 = arith.constant 0 : index
    %c0_18 = arith.constant 0 : index
    %32 = vector.load %arg6[%c0_17, %c0_18] : memref<8x1xf32, #tpu.memory_space<vmem>>, vector<8x1xf32>
    %33 = vector.broadcast %32 : vector<8x1xf32> to vector<8x128xf32>
    %34 = arith.addf %31, %33 : vector<8x128xf32>
    %35 = arith.addf %28, %34 : vector<8x128xf32>
    %cst_19 = arith.constant 0.000000e+00 : f32
    %36 = vector.broadcast %cst_19 : f32 to vector<8x128xf32>
    %37 = arith.maximumf %35, %36 : vector<8x128xf32>
    %cst_20 = arith.constant 0.000000e+00 : f32
    %38 = vector.broadcast %cst_20 : f32 to vector<8x128xf32>
    %39 = tpu.concatenate %38, %37 in 1 : vector<8x128xf32>, vector<8x128xf32> -> vector<8x256xf32>
    %40 = vector.extract_strided_slice %39 {offsets = [0, 120], sizes = [8, 128], strides = [1, 1]} : vector<8x256xf32> to vector<8x128xf32>
    %41 = vector.extract_strided_slice %39 {offsets = [0, 124], sizes = [8, 128], strides = [1, 1]} : vector<8x256xf32> to vector<8x128xf32>
    %42 = vector.extract_strided_slice %39 {offsets = [0, 128], sizes = [8, 128], strides = [1, 1]} : vector<8x256xf32> to vector<8x128xf32>
    %43 = tpu.concatenate %40, %41, %42 in 0 : vector<8x128xf32>, vector<8x128xf32>, vector<8x128xf32> -> vector<24x128xf32>
    %44 = arith.truncf %43 : vector<24x128xf32> to vector<24x128xbf16>
    %c0_21 = arith.constant 0 : index
    %c0_22 = arith.constant 0 : index
    %45 = vector.load %arg7[%c0_21, %c0_22] : memref<16x24xbf16, #tpu.memory_space<vmem>>, vector<16x24xbf16>
    %cst_23 = arith.constant dense<0.000000e+00> : vector<16x128xf32>
    %46 = tpu.matmul %45, %44, %cst_23 {dimension_numbers = #tpu.dot_dimension_numbers<[1], [0], [0], [1], [0, 0, 1, 1], [], []>} : vector<16x24xbf16>, vector<24x128xbf16>, vector<16x128xf32> -> vector<16x128xf32>
    %c0_24 = arith.constant 0 : index
    %c0_25 = arith.constant 0 : index
    %47 = vector.load %arg8[%c0_24, %c0_25] : memref<16x1xf32, #tpu.memory_space<vmem>>, vector<16x1xf32>
    %48 = vector.broadcast %47 : vector<16x1xf32> to vector<16x128xf32>
    %49 = arith.addf %46, %48 : vector<16x128xf32>
    %cst_26 = arith.constant 0.000000e+00 : f32
    %50 = vector.broadcast %cst_26 : f32 to vector<16x128xf32>
    %51 = arith.maximumf %49, %50 : vector<16x128xf32>
    %cst_27 = arith.constant 0.000000e+00 : f32
    %52 = vector.broadcast %cst_27 : f32 to vector<16x128xf32>
    %53 = tpu.concatenate %52, %51 in 1 : vector<16x128xf32>, vector<16x128xf32> -> vector<16x256xf32>
    %54 = vector.extract_strided_slice %53 {offsets = [0, 120], sizes = [16, 128], strides = [1, 1]} : vector<16x256xf32> to vector<16x128xf32>
    %55 = vector.extract_strided_slice %53 {offsets = [0, 124], sizes = [16, 128], strides = [1, 1]} : vector<16x256xf32> to vector<16x128xf32>
    %56 = vector.extract_strided_slice %53 {offsets = [0, 128], sizes = [16, 128], strides = [1, 1]} : vector<16x256xf32> to vector<16x128xf32>
    %57 = tpu.concatenate %54, %55, %56 in 0 : vector<16x128xf32>, vector<16x128xf32>, vector<16x128xf32> -> vector<48x128xf32>
    %58 = arith.truncf %57 : vector<48x128xf32> to vector<48x128xbf16>
    %c0_28 = arith.constant 0 : index
    %c0_29 = arith.constant 0 : index
    %59 = vector.load %arg9[%c0_28, %c0_29] : memref<16x48xbf16, #tpu.memory_space<vmem>>, vector<16x48xbf16>
    %cst_30 = arith.constant dense<0.000000e+00> : vector<16x128xf32>
    %60 = tpu.matmul %59, %58, %cst_30 {dimension_numbers = #tpu.dot_dimension_numbers<[1], [0], [0], [1], [0, 0, 1, 1], [], []>} : vector<16x48xbf16>, vector<48x128xbf16>, vector<16x128xf32> -> vector<16x128xf32>
    %c0_31 = arith.constant 0 : index
    %c0_32 = arith.constant 0 : index
    %61 = vector.load %arg10[%c0_31, %c0_32] : memref<16x1xf32, #tpu.memory_space<vmem>>, vector<16x1xf32>
    %62 = vector.broadcast %61 : vector<16x1xf32> to vector<16x128xf32>
    %63 = arith.addf %60, %62 : vector<16x128xf32>
    %cst_33 = arith.constant 0.000000e+00 : f32
    %64 = vector.broadcast %cst_33 : f32 to vector<16x128xf32>
    %65 = arith.maximumf %63, %64 : vector<16x128xf32>
    %c0_34 = arith.constant 0 : index
    %c0_35 = arith.constant 0 : index
    %66 = vector.load %arg11[%c0_34, %c0_35] : memref<16x8xbf16, #tpu.memory_space<vmem>>, vector<16x8xbf16>
    %67 = arith.truncf %37 : vector<8x128xf32> to vector<8x128xbf16>
    %cst_36 = arith.constant dense<0.000000e+00> : vector<16x128xf32>
    %68 = tpu.matmul %66, %67, %cst_36 {dimension_numbers = #tpu.dot_dimension_numbers<[1], [0], [0], [1], [0, 0, 1, 1], [], []>} : vector<16x8xbf16>, vector<8x128xbf16>, vector<16x128xf32> -> vector<16x128xf32>
    %c0_37 = arith.constant 0 : index
    %c0_38 = arith.constant 0 : index
    %69 = vector.load %arg12[%c0_37, %c0_38] : memref<16x1xf32, #tpu.memory_space<vmem>>, vector<16x1xf32>
    %70 = vector.broadcast %69 : vector<16x1xf32> to vector<16x128xf32>
    %71 = arith.addf %68, %70 : vector<16x128xf32>
    %72 = arith.addf %65, %71 : vector<16x128xf32>
    %cst_39 = arith.constant 0.000000e+00 : f32
    %73 = vector.broadcast %cst_39 : f32 to vector<16x128xf32>
    %74 = arith.maximumf %72, %73 : vector<16x128xf32>
    %75 = vector.extract_strided_slice %74 {offsets = [0, 0], sizes = [16, 2], strides = [1, 1]} : vector<16x128xf32> to vector<16x2xf32>
    %76 = vector.extract_strided_slice %74 {offsets = [0, 2], sizes = [16, 2], strides = [1, 1]} : vector<16x128xf32> to vector<16x2xf32>
    %77 = vector.extract_strided_slice %74 {offsets = [0, 4], sizes = [16, 2], strides = [1, 1]} : vector<16x128xf32> to vector<16x2xf32>
    %78 = vector.extract_strided_slice %74 {offsets = [0, 6], sizes = [16, 2], strides = [1, 1]} : vector<16x128xf32> to vector<16x2xf32>
    %79 = vector.extract_strided_slice %74 {offsets = [0, 8], sizes = [16, 2], strides = [1, 1]} : vector<16x128xf32> to vector<16x2xf32>
    %80 = vector.extract_strided_slice %74 {offsets = [0, 10], sizes = [16, 2], strides = [1, 1]} : vector<16x128xf32> to vector<16x2xf32>
    %81 = vector.extract_strided_slice %74 {offsets = [0, 12], sizes = [16, 2], strides = [1, 1]} : vector<16x128xf32> to vector<16x2xf32>
    %82 = vector.extract_strided_slice %74 {offsets = [0, 14], sizes = [16, 2], strides = [1, 1]} : vector<16x128xf32> to vector<16x2xf32>
    %83 = tpu.concatenate %75, %76, %77, %78, %79, %80, %81, %82 in 0 : vector<16x2xf32>, vector<16x2xf32>, vector<16x2xf32>, vector<16x2xf32>, vector<16x2xf32>, vector<16x2xf32>, vector<16x2xf32>, vector<16x2xf32> -> vector<128x2xf32>
    %c0_40 = arith.constant 0 : index
    %c0_41 = arith.constant 0 : index
    %84 = vector.load %arg13[%c0_40, %c0_41] : memref<64x128xbf16, #tpu.memory_space<vmem>>, vector<64x128xbf16>
    %85 = arith.truncf %83 : vector<128x2xf32> to vector<128x2xbf16>
    %cst_42 = arith.constant dense<0.000000e+00> : vector<64x2xf32>
    %86 = tpu.matmul %84, %85, %cst_42 {dimension_numbers = #tpu.dot_dimension_numbers<[1], [0], [0], [1], [0, 0, 1, 1], [], []>} : vector<64x128xbf16>, vector<128x2xbf16>, vector<64x2xf32> -> vector<64x2xf32>
    %c0_43 = arith.constant 0 : index
    %c0_44 = arith.constant 0 : index
    %87 = vector.load %arg14[%c0_43, %c0_44] : memref<64x1xf32, #tpu.memory_space<vmem>>, vector<64x1xf32>
    %88 = vector.broadcast %87 : vector<64x1xf32> to vector<64x2xf32>
    %89 = arith.addf %86, %88 : vector<64x2xf32>
    %cst_45 = arith.constant 0.000000e+00 : f32
    %90 = vector.broadcast %cst_45 : f32 to vector<64x2xf32>
    %91 = arith.maximumf %89, %90 : vector<64x2xf32>
    %c0_46 = arith.constant 0 : index
    %c0_47 = arith.constant 0 : index
    %92 = vector.load %arg15[%c0_46, %c0_47] : memref<8x64xbf16, #tpu.memory_space<vmem>>, vector<8x64xbf16>
    %93 = arith.truncf %91 : vector<64x2xf32> to vector<64x2xbf16>
    %cst_48 = arith.constant dense<0.000000e+00> : vector<8x2xf32>
    %94 = tpu.matmul %92, %93, %cst_48 {dimension_numbers = #tpu.dot_dimension_numbers<[1], [0], [0], [1], [0, 0, 1, 1], [], []>} : vector<8x64xbf16>, vector<64x2xbf16>, vector<8x2xf32> -> vector<8x2xf32>
    %c0_49 = arith.constant 0 : index
    %c0_50 = arith.constant 0 : index
    %95 = vector.load %arg16[%c0_49, %c0_50] : memref<8x1xf32, #tpu.memory_space<vmem>>, vector<8x1xf32>
    %96 = vector.broadcast %95 : vector<8x1xf32> to vector<8x2xf32>
    %97 = arith.addf %94, %96 : vector<8x2xf32>
    %c0_51 = arith.constant 0 : index
    %c0_52 = arith.constant 0 : index
    %98 = vector.load %arg17[%c0_51, %c0_52] : memref<8x2xf32, #tpu.memory_space<vmem>>, vector<8x2xf32>
    tpu.vector_store %arg17[%c0_51, %c0_52], %97 {strides = array<i32>} : memref<8x2xf32, #tpu.memory_space<vmem>>, vector<8x2xf32>,
    return
  }
}

</mosaic_0001>

<llo_original>
// kernel: tpu_custom_call.1
$region0: #{tpu_custom_call.1}
  #allocation0 [shape = 'u32[]', space=smem, size = 0x4, offset = 0x4, fixed_abs, tag = 'smem constant byte address 0x4 - core index']
  #allocation1 [shape = 'u32[144,128]{1,0:T(1,128)}', space=vmem, size = 0x12000, scoped, tag = 'internal scratch']
  %s0 = inlined_call_operand.vmem [shape: f32[8,128], index: 0, kind: input, shape index: {}]
  %s1 = inlined_call_operand.vmem [shape: bf16[8,24], index: 1, kind: input, shape index: {}]
  %s2 = inlined_call_operand.vmem [shape: f32[8,1], index: 2, kind: input, shape index: {}]
  %s3 = inlined_call_operand.vmem [shape: bf16[8,24], index: 3, kind: input, shape index: {}]
  %s4 = inlined_call_operand.vmem [shape: f32[8,1], index: 4, kind: input, shape index: {}]
  %s5 = inlined_call_operand.vmem [shape: bf16[8,8], index: 5, kind: input, shape index: {}]
  %s6 = inlined_call_operand.vmem [shape: f32[8,1], index: 6, kind: input, shape index: {}]
  %s7 = inlined_call_operand.vmem [shape: bf16[16,24], index: 7, kind: input, shape index: {}]
  %s8 = inlined_call_operand.vmem [shape: f32[16,1], index: 8, kind: input, shape index: {}]
  %s9 = inlined_call_operand.vmem [shape: bf16[16,48], index: 9, kind: input, shape index: {}]
  %s10 = inlined_call_operand.vmem [shape: f32[16,1], index: 10, kind: input, shape index: {}]
  %s11 = inlined_call_operand.vmem [shape: bf16[16,8], index: 11, kind: input, shape index: {}]
  %s12 = inlined_call_operand.vmem [shape: f32[16,1], index: 12, kind: input, shape index: {}]
  %s13 = inlined_call_operand.vmem [shape: bf16[64,128], index: 13, kind: input, shape index: {}]
  %s14 = inlined_call_operand.vmem [shape: f32[64,1], index: 14, kind: input, shape index: {}]
  %s15 = inlined_call_operand.vmem [shape: bf16[8,64], index: 15, kind: input, shape index: {}]
  %s16 = inlined_call_operand.vmem [shape: f32[8,1], index: 16, kind: input, shape index: {}]
  %s17 = inlined_call_operand.vmem [shape: f32[8,2], index: 17, kind: output, shape index: {}]
  %s18 = sld [smem:[#allocation0]]
  $region78: #{tpu_custom_call.1} parent=0
    _
  %s20 = ssub.s32 1, %s18
  %s21 = scalar_select 0, %s20, %s18
  // Predicated region
  $region2: #{tpu_custom_call.1} parent=0 // pred_check
    _
  $region3: #{tpu_custom_call.1} parent=0 // pred_check_branch
    %23 = sbr.rel (0) target = $region5
  $region4: #{tpu_custom_call.1} parent=0 // pred_region
    _
  $region5: #{tpu_custom_call.1} parent=0 // pred_fallthru
    _
  // Predicated region
  $region6: #{tpu_custom_call.1} parent=0 // pred_check
    _
  $region7: #{tpu_custom_call.1} parent=0 // pred_check_branch
    %25 = sbr.rel (0) target = $region9
  $region8: #{tpu_custom_call.1} parent=0 // pred_region
    _
  $region9: #{tpu_custom_call.1} parent=0 // pred_fallthru
    _
  // Predicated region
  $region10: #{tpu_custom_call.1} parent=0 // pred_check
    _
  $region11: #{tpu_custom_call.1} parent=0 // pred_check_branch
    %27 = sbr.rel (0) target = $region13
  $region12: #{tpu_custom_call.1} parent=0 // pred_region
    _
  $region13: #{tpu_custom_call.1} parent=0 // pred_fallthru
    _
  // Predicated region
  $region14: #{tpu_custom_call.1} parent=0 // pred_check
    _
  $region15: #{tpu_custom_call.1} parent=0 // pred_check_branch
    %29 = sbr.rel (0) target = $region17
  $region16: #{tpu_custom_call.1} parent=0 // pred_region
    _
  $region17: #{tpu_custom_call.1} parent=0 // pred_fallthru
    _
  // Predicated region
  $region18: #{tpu_custom_call.1} parent=0 // pred_check
    _
  $region19: #{tpu_custom_call.1} parent=0 // pred_check_branch
    %31 = sbr.rel (0) target = $region21
  $region20: #{tpu_custom_call.1} parent=0 // pred_region
    _
  $region21: #{tpu_custom_call.1} parent=0 // pred_fallthru
    _
  // Predicated region
  $region22: #{tpu_custom_call.1} parent=0 // pred_check
    _
  $region23: #{tpu_custom_call.1} parent=0 // pred_check_branch
    %33 = sbr.rel (0) target = $region25
  $region24: #{tpu_custom_call.1} parent=0 // pred_region
    _
  $region25: #{tpu_custom_call.1} parent=0 // pred_fallthru
    _
  // Predicated region
  $region26: #{tpu_custom_call.1} parent=0 // pred_check
    _
  $region27: #{tpu_custom_call.1} parent=0 // pred_check_branch
    %35 = sbr.rel (0) target = $region29
  $region28: #{tpu_custom_call.1} parent=0 // pred_region
    _
  $region29: #{tpu_custom_call.1} parent=0 // pred_fallthru
    _
  // Predicated region
  $region30: #{tpu_custom_call.1} parent=0 // pred_check
    _
  $region31: #{tpu_custom_call.1} parent=0 // pred_check_branch
    %37 = sbr.rel (0) target = $region33
  $region32: #{tpu_custom_call.1} parent=0 // pred_region
    _
  $region33: #{tpu_custom_call.1} parent=0 // pred_fallthru
    _
  // Predicated region
  $region34: #{tpu_custom_call.1} parent=0 // pred_check
    _
  $region35: #{tpu_custom_call.1} parent=0 // pred_check_branch
    %39 = sbr.rel (0) target = $region37
  $region36: #{tpu_custom_call.1} parent=0 // pred_region
    _
  $region37: #{tpu_custom_call.1} parent=0 // pred_fallthru
    _
  // Predicated region
  $region38: #{tpu_custom_call.1} parent=0 // pred_check
    _
  $region39: #{tpu_custom_call.1} parent=0 // pred_check_branch
    %41 = sbr.rel (0) target = $region41
  $region40: #{tpu_custom_call.1} parent=0 // pred_region
    _
  $region41: #{tpu_custom_call.1} parent=0 // pred_fallthru
    _
  // Predicated region
  $region42: #{tpu_custom_call.1} parent=0 // pred_check
    _
  $region43: #{tpu_custom_call.1} parent=0 // pred_check_branch
    %43 = sbr.rel (0) target = $region45
  $region44: #{tpu_custom_call.1} parent=0 // pred_region
    _
  $region45: #{tpu_custom_call.1} parent=0 // pred_fallthru
    _
  // Predicated region
  $region46: #{tpu_custom_call.1} parent=0 // pred_check
    _
  $region47: #{tpu_custom_call.1} parent=0 // pred_check_branch
    %45 = sbr.rel (0) target = $region49
  $region48: #{tpu_custom_call.1} parent=0 // pred_region
    _
  $region49: #{tpu_custom_call.1} parent=0 // pred_fallthru
    _
  // Predicated region
  $region50: #{tpu_custom_call.1} parent=0 // pred_check
    _
  $region51: #{tpu_custom_call.1} parent=0 // pred_check_branch
    %47 = sbr.rel (0) target = $region53
  $region52: #{tpu_custom_call.1} parent=0 // pred_region
    _
  $region53: #{tpu_custom_call.1} parent=0 // pred_fallthru
    _
  // Predicated region
  $region54: #{tpu_custom_call.1} parent=0 // pred_check
    _
  $region55: #{tpu_custom_call.1} parent=0 // pred_check_branch
    %49 = sbr.rel (0) target = $region57
  $region56: #{tpu_custom_call.1} parent=0 // pred_region
    _
  $region57: #{tpu_custom_call.1} parent=0 // pred_fallthru
    _
  // Predicated region
  $region58: #{tpu_custom_call.1} parent=0 // pred_check
    _
  $region59: #{tpu_custom_call.1} parent=0 // pred_check_branch
    %51 = sbr.rel (0) target = $region61
  $region60: #{tpu_custom_call.1} parent=0 // pred_region
    _
  $region61: #{tpu_custom_call.1} parent=0 // pred_fallthru
    _
  // Predicated region
  $region62: #{tpu_custom_call.1} parent=0 // pred_check
    _
  $region63: #{tpu_custom_call.1} parent=0 // pred_check_branch
    %53 = sbr.rel (0) target = $region65
  $region64: #{tpu_custom_call.1} parent=0 // pred_region
    _
  $region65: #{tpu_custom_call.1} parent=0 // pred_fallthru
    _
  // Predicated region
  $region66: #{tpu_custom_call.1} parent=0 // pred_check
    _
  $region67: #{tpu_custom_call.1} parent=0 // pred_check_branch
    %55 = sbr.rel (0) target = $region69
  $region68: #{tpu_custom_call.1} parent=0 // pred_region
    _
  $region69: #{tpu_custom_call.1} parent=0 // pred_fallthru
    _
  %v57 = vld [vmem:[%s0] sm:$0xff]
  %60 = vrot.lane.b32.xlu0 0.0, 126
  %v61 = vpop.permute.xlu0 %60
  %62 = vrot.lane.b32.xlu0 %v57, 126
  %v63 = vpop.permute.xlu0 %62
  %vm64 = vcmask 1031168
  %v65 = vsel %vm64, %v61, %v63
  %68 = vrot.lane.b32.xlu0 %v57, 124
  %v69 = vpop.permute.xlu0 %68
  %v71 = vpack.c.bf16 %v65, 0.0
  %v72 = vpack.c.bf16 %v63, %v57
  %v73 = vpack.c.bf16 %v69, %v69
  %v74 = vld [vmem:[%s1] sm:$0xf]
  %v75 = vld [vmem:[%s2] sm:$0xff]
  %77 = vset.pattern.permute.xlu0 0
  %78 = vperm.xlu0 %77, %v75
  %v79 = vpop.permute.xlu0 %78
  %84 = vrot.lane.b32.xlu0 %v71, 4
  %v85 = vpop.permute.xlu0 %84
  %86 = vrot.lane.b32.xlu0 %v72, 4
  %v87 = vpop.permute.xlu0 %86
  %88 = vrot.lane.b32.xlu0 %v73, 4
  %v89 = vpop.permute.xlu0 %88
  %vm90 = vcmask 31744
  %v91 = vsel %vm90, %v85, %v87
  %vm93 = vcmask 195584
  %v95 = vsel %vm93, %v74, 0
  %vm97 = vcmask 1043456
  %v99 = vsel %vm97, %v89, 0
  %101 = vmatprep.subr.bf16.mxu0 0
  %102 = vmatpush1.bf16.msra.mxu0 %v91
  %103 = vmatprep.subr.bf16.mxu0 0
  %104 = vmatpush1.bf16.msra.mxu0 %v99
  %105 = vmatprep.subr.bf16.mxu0 0
  %106 = vmatpush1.bf16.msra.mxu0 0
  %107 = vmatprep.subr.bf16.mxu0 0
  %108 = vmatpush1.bf16.msra.mxu0 0
  %109 = vmatprep.subr.bf16.mxu0 0
  %110 = vmatpush1.bf16.msra.mxu0 0
  %111 = vmatprep.subr.bf16.mxu0 0
  %112 = vmatpush1.bf16.msra.mxu0 0
  %113 = vmatprep.subr.bf16.mxu0 0
  %114 = vmatpush1.bf16.msra.mxu0 0
  %115 = vmatprep.subr.bf16.mxu0 0
  %116 = vmatpush1.bf16.msra.mxu0 0
  %117 = vmatprep.subr.bf16.mxu0 0
  %118 = vmatpush1.bf16.msra.mxu0 0
  %119 = vmatprep.subr.bf16.mxu0 0
  %120 = vmatpush1.bf16.msra.mxu0 0
  %121 = vmatprep.subr.bf16.mxu0 0
  %122 = vmatpush1.bf16.msra.mxu0 0
  %123 = vmatprep.subr.bf16.mxu0 0
  %124 = vmatpush1.bf16.msra.mxu0 0
  %125 = vmatprep.subr.bf16.mxu0 0
  %126 = vmatpush1.bf16.msra.mxu0 0
  %127 = vmatprep.subr.bf16.mxu0 0
  %128 = vmatpush1.bf16.msra.mxu0 0
  %129 = vmatprep.subr.bf16.mxu0 0
  %130 = vmatpush1.bf16.msra.mxu0 0
  %131 = vmatprep.subr.bf16.mxu0 0
  %132 = vmatpush1.bf16.msra.mxu0 0
  %133 = vmatprep.mubr.bf16.mxu0 0
  %134 = vmatmul.mubr.bf16.gmra.mrb[0].mxu0 %v95
  %v135 = vpop.f32.mrb[0].mxu0
  %v136 = vadd.f32 %v79, %v135
  %v137 = vpop.f32.mrb[0].mxu0
  %v138 = vpop.f32.mrb[0].mxu0
  %v139 = vpop.f32.mrb[0].mxu0
  %140 = vdwg.mxu0
  %v141 = vmax.f32 %v136, 0.0
  %143 = vrot.lane.b32.xlu0 %v141, 126
  %v144 = vpop.permute.xlu0 %143
  %v145 = vsel %vm64, %v61, %v144
  %148 = vrot.lane.b32.xlu0 %v141, 124
  %v149 = vpop.permute.xlu0 %148
  %v151 = vpack.c.bf16 %v145, 0.0
  %v152 = vpack.c.bf16 %v144, %v141
  %v153 = vpack.c.bf16 %v149, %v149
  %v154 = vld [vmem:[%s3] sm:$0xf]
  %v155 = vld [vmem:[%s4] sm:$0xff]
  %157 = vset.pattern.permute.xlu0 0
  %158 = vperm.xlu0 %157, %v155
  %v159 = vpop.permute.xlu0 %158
  %164 = vrot.lane.b32.xlu0 %v151, 4
  %v165 = vpop.permute.xlu0 %164
  %166 = vrot.lane.b32.xlu0 %v152, 4
  %v167 = vpop.permute.xlu0 %166
  %168 = vrot.lane.b32.xlu0 %v153, 4
  %v169 = vpop.permute.xlu0 %168
  %v170 = vsel %vm90, %v165, %v167
  %v173 = vsel %vm93, %v154, 0
  %v176 = vsel %vm97, %v169, 0
  %178 = vmatprep.subr.bf16.mxu0 0
  %179 = vmatpush1.bf16.msra.mxu0 %v170
  %180 = vmatprep.subr.bf16.mxu0 0
  %181 = vmatpush1.bf16.msra.mxu0 %v176
  %182 = vmatprep.subr.bf16.mxu0 0
  %183 = vmatpush1.bf16.msra.mxu0 0
  %184 = vmatprep.subr.bf16.mxu0 0
  %185 = vmatpush1.bf16.msra.mxu0 0
  %186 = vmatprep.subr.bf16.mxu0 0
  %187 = vmatpush1.bf16.msra.mxu0 0
  %188 = vmatprep.subr.bf16.mxu0 0
  %189 = vmatpush1.bf16.msra.mxu0 0
  %190 = vmatprep.subr.bf16.mxu0 0
  %191 = vmatpush1.bf16.msra.mxu0 0
  %192 = vmatprep.subr.bf16.mxu0 0
  %193 = vmatpush1.bf16.msra.mxu0 0
  %194 = vmatprep.subr.bf16.mxu0 0
  %195 = vmatpush1.bf16.msra.mxu0 0
  %196 = vmatprep.subr.bf16.mxu0 0
  %197 = vmatpush1.bf16.msra.mxu0 0
  %198 = vmatprep.subr.bf16.mxu0 0
  %199 = vmatpush1.bf16.msra.mxu0 0
  %200 = vmatprep.subr.bf16.mxu0 0
  %201 = vmatpush1.bf16.msra.mxu0 0
  %202 = vmatprep.subr.bf16.mxu0 0
  %203 = vmatpush1.bf16.msra.mxu0 0
  %204 = vmatprep.subr.bf16.mxu0 0
  %205 = vmatpush1.bf16.msra.mxu0 0
  %206 = vmatprep.subr.bf16.mxu0 0
  %207 = vmatpush1.bf16.msra.mxu0 0
  %208 = vmatprep.subr.bf16.mxu0 0
  %209 = vmatpush1.bf16.msra.mxu0 0
  %210 = vmatprep.mubr.bf16.mxu0 0
  %211 = vmatmul.mubr.bf16.gmra.mrb[0].mxu0 %v173
  %v212 = vpop.f32.mrb[0].mxu0
  %v213 = vadd.f32 %v159, %v212
  %v214 = vpop.f32.mrb[0].mxu0
  %v215 = vpop.f32.mrb[0].mxu0
  %v216 = vpop.f32.mrb[0].mxu0
  %217 = vdwg.mxu0
  %v218 = vmax.f32 %v213, 0.0
  %v219 = vld [vmem:[%s5] sm:$0xf]
  %v220 = vpack.c.bf16 %v57, %v57
  %v221 = vld [vmem:[%s6] sm:$0xff]
  %223 = vset.pattern.permute.xlu0 0
  %224 = vperm.xlu0 %223, %v221
  %v225 = vpop.permute.xlu0 %224
  %vm227 = vcmask 64512
  %v229 = vsel %vm227, %v219, 0
  %v232 = vsel %vm97, %v220, 0
  %234 = vmatprep.subr.bf16.mxu0 0
  %235 = vmatpush1.bf16.msra.mxu0 %v232
  %236 = vmatprep.subr.bf16.mxu0 0
  %237 = vmatpush1.bf16.msra.mxu0 0
  %238 = vmatprep.subr.bf16.mxu0 0
  %239 = vmatpush1.bf16.msra.mxu0 0
  %240 = vmatprep.subr.bf16.mxu0 0
  %241 = vmatpush1.bf16.msra.mxu0 0
  %242 = vmatprep.subr.bf16.mxu0 0
  %243 = vmatpush1.bf16.msra.mxu0 0
  %244 = vmatprep.subr.bf16.mxu0 0
  %245 = vmatpush1.bf16.msra.mxu0 0
  %246 = vmatprep.subr.bf16.mxu0 0
  %247 = vmatpush1.bf16.msra.mxu0 0
  %248 = vmatprep.subr.bf16.mxu0 0
  %249 = vmatpush1.bf16.msra.mxu0 0
  %250 = vmatprep.subr.bf16.mxu0 0
  %251 = vmatpush1.bf16.msra.mxu0 0
  %252 = vmatprep.subr.bf16.mxu0 0
  %253 = vmatpush1.bf16.msra.mxu0 0
  %254 = vmatprep.subr.bf16.mxu0 0
  %255 = vmatpush1.bf16.msra.mxu0 0
  %256 = vmatprep.subr.bf16.mxu0 0
  %257 = vmatpush1.bf16.msra.mxu0 0
  %258 = vmatprep.subr.bf16.mxu0 0
  %259 = vmatpush1.bf16.msra.mxu0 0
  %260 = vmatprep.subr.bf16.mxu0 0
  %261 = vmatpush1.bf16.msra.mxu0 0
  %262 = vmatprep.subr.bf16.mxu0 0
  %263 = vmatpush1.bf16.msra.mxu0 0
  %264 = vmatprep.subr.bf16.mxu0 0
  %265 = vmatpush1.bf16.msra.mxu0 0
  %266 = vmatprep.mubr.bf16.mxu0 0
  %267 = vmatmul.mubr.bf16.gmra.mrb[0].mxu0 %v229
  %v268 = vpop.f32.mrb[0].mxu0
  %v269 = vadd.f32 %v225, %v268
  %v270 = vpop.f32.mrb[0].mxu0
  %v271 = vpop.f32.mrb[0].mxu0
  %v272 = vpop.f32.mrb[0].mxu0
  %273 = vdwg.mxu0
  %v274 = vadd.f32 %v218, %v269
  %v275 = vmax.f32 %v274, 0.0
  %277 = vrot.lane.b32.xlu0 0.0, 124
  %v278 = vpop.permute.xlu0 %277
  %279 = vrot.lane.b32.xlu0 %v275, 124
  %v280 = vpop.permute.xlu0 %279
  %vm281 = vcmask 1014784
  %v282 = vsel %vm281, %v278, %v280
  %285 = vrot.lane.b32.xlu0 %v275, 120
  %v286 = vpop.permute.xlu0 %285
  %v288 = vpack.c.bf16 %v282, 0.0
  %v289 = vpack.c.bf16 %v280, %v275
  %v290 = vpack.c.bf16 %v286, %v286
  %v291 = vld [vmem:[%s7] sm:$0xf]
  %v292 = vld [vmem:[%s7 + $0x4] sm:$0xf]
  %v293 = vld [vmem:[%s8] sm:$0xff]
  %v294 = vld [vmem:[%s8 + $0x8] sm:$0xff]
  %296 = vset.pattern.permute.xlu0 0
  %297 = vperm.xlu0 %296, %v293
  %v298 = vpop.permute.xlu0 %297
  %301 = vset.pattern.permute.xlu0 0
  %302 = vperm.xlu0 %301, %v294
  %v303 = vpop.permute.xlu0 %302
  %v307 = vunpack.c.l.b16 %v291
  %v308 = vunpack.c.l.b16 %v292
  %v309 = vpack.c.b16 %v308, %v307
  %313 = vrot.lane.b32.xlu0 %v288, 8
  %v314 = vpop.permute.xlu0 %313
  %315 = vrot.lane.b32.xlu0 %v289, 8
  %v316 = vpop.permute.xlu0 %315
  %317 = vrot.lane.b32.xlu0 %v290, 8
  %v318 = vpop.permute.xlu0 %317
  %vm319 = vcmask 64512
  %v320 = vsel %vm319, %v314, %v316
  %v323 = vsel %vm93, %v309, 0
  %v326 = vsel %vm97, %v318, 0
  %328 = vmatprep.subr.bf16.mxu0 0
  %329 = vmatpush1.bf16.msra.mxu0 %v320
  %330 = vmatprep.subr.bf16.mxu0 0
  %331 = vmatpush1.bf16.msra.mxu0 %v326
  %332 = vmatprep.subr.bf16.mxu0 0
  %333 = vmatpush1.bf16.msra.mxu0 0
  %334 = vmatprep.subr.bf16.mxu0 0
  %335 = vmatpush1.bf16.msra.mxu0 0
  %336 = vmatprep.subr.bf16.mxu0 0
  %337 = vmatpush1.bf16.msra.mxu0 0
  %338 = vmatprep.subr.bf16.mxu0 0
  %339 = vmatpush1.bf16.msra.mxu0 0
  %340 = vmatprep.subr.bf16.mxu0 0
  %341 = vmatpush1.bf16.msra.mxu0 0
  %342 = vmatprep.subr.bf16.mxu0 0
  %343 = vmatpush1.bf16.msra.mxu0 0
  %344 = vmatprep.subr.bf16.mxu0 0
  %345 = vmatpush1.bf16.msra.mxu0 0
  %346 = vmatprep.subr.bf16.mxu0 0
  %347 = vmatpush1.bf16.msra.mxu0 0
  %348 = vmatprep.subr.bf16.mxu0 0
  %349 = vmatpush1.bf16.msra.mxu0 0
  %350 = vmatprep.subr.bf16.mxu0 0
  %351 = vmatpush1.bf16.msra.mxu0 0
  %352 = vmatprep.subr.bf16.mxu0 0
  %353 = vmatpush1.bf16.msra.mxu0 0
  %354 = vmatprep.subr.bf16.mxu0 0
  %355 = vmatpush1.bf16.msra.mxu0 0
  %356 = vmatprep.subr.bf16.mxu0 0
  %357 = vmatpush1.bf16.msra.mxu0 0
  %358 = vmatprep.subr.bf16.mxu0 0
  %359 = vmatpush1.bf16.msra.mxu0 0
  %360 = vmatprep.mubr.bf16.mxu0 0
  %361 = vmatmul.mubr.bf16.gmra.mrb[0].mxu0 %v323
  %v362 = vpop.f32.mrb[0].mxu0
  %v363 = vadd.f32 %v298, %v362
  %v364 = vpop.f32.mrb[0].mxu0
  %v365 = vpop.f32.mrb[0].mxu0
  %v366 = vadd.f32 %v303, %v365
  %v367 = vpop.f32.mrb[0].mxu0
  %368 = vdwg.mxu0
  %v369 = vmax.f32 %v363, 0.0
  %v370 = vmax.f32 %v366, 0.0
  %373 = vrot.lane.b32.xlu0 %v369, 124
  %v374 = vpop.permute.xlu0 %373
  %375 = vrot.lane.b32.xlu0 %v370, 124
  %v376 = vpop.permute.xlu0 %375
  %v377 = vsel %vm281, %v278, %v374
  %v378 = vsel %vm281, %v278, %v376
  %383 = vrot.lane.b32.xlu0 %v369, 120
  %v384 = vpop.permute.xlu0 %383
  %385 = vrot.lane.b32.xlu0 %v370, 120
  %v386 = vpop.permute.xlu0 %385
  %v389 = vpack.c.bf16 0.0, 0.0
  %v390 = vpack.c.bf16 %v370, %v369
  %v391 = vpack.c.bf16 %v378, %v377
  %v392 = vpack.c.bf16 %v376, %v374
  %v393 = vpack.c.bf16 %v386, %v384
  %v394 = vld [vmem:[%s9] sm:$0xf]
  %v395 = vld [vmem:[%s9 + $0x4] sm:$0xf]
  %v396 = vld [vmem:[%s10] sm:$0xff]
  %v397 = vld [vmem:[%s10 + $0x8] sm:$0xff]
  %399 = vset.pattern.permute.xlu0 0
  %400 = vperm.xlu0 %399, %v396
  %v401 = vpop.permute.xlu0 %400
  %404 = vset.pattern.permute.xlu0 0
  %405 = vperm.xlu0 %404, %v397
  %v406 = vpop.permute.xlu0 %405
  %v410 = vunpack.c.l.b16 %v394
  %v411 = vunpack.c.l.b16 %v395
  %v412 = vpack.c.b16 %v411, %v410
  %418 = vrot.lane.b32.xlu0 %v389, 8
  %v419 = vpop.permute.xlu0 %418
  %420 = vrot.lane.b32.xlu0 %v390, 8
  %v421 = vpop.permute.xlu0 %420
  %422 = vrot.lane.b32.xlu0 %v391, 8
  %v423 = vpop.permute.xlu0 %422
  %424 = vrot.lane.b32.xlu0 %v392, 8
  %v425 = vpop.permute.xlu0 %424
  %426 = vrot.lane.b32.xlu0 %v393, 8
  %v427 = vpop.permute.xlu0 %426
  %v428 = vsel %vm319, %v419, %v421
  %v429 = vsel %vm319, %v423, %v425
  %vm433 = vcmask 392192
  %v435 = vsel %vm433, %v412, 0
  %437 = vmatprep.subr.bf16.mxu0 0
  %438 = vmatpush1.bf16.msra.mxu0 %v428
  %439 = vmatprep.subr.bf16.mxu0 0
  %440 = vmatpush1.bf16.msra.mxu0 %v429
  %441 = vmatprep.subr.bf16.mxu0 0
  %442 = vmatpush1.bf16.msra.mxu0 %v427
  %443 = vmatprep.subr.bf16.mxu0 0
  %444 = vmatpush1.bf16.msra.mxu0 0
  %445 = vmatprep.subr.bf16.mxu0 0
  %446 = vmatpush1.bf16.msra.mxu0 0
  %447 = vmatprep.subr.bf16.mxu0 0
  %448 = vmatpush1.bf16.msra.mxu0 0
  %449 = vmatprep.subr.bf16.mxu0 0
  %450 = vmatpush1.bf16.msra.mxu0 0
  %451 = vmatprep.subr.bf16.mxu0 0
  %452 = vmatpush1.bf16.msra.mxu0 0
  %453 = vmatprep.subr.bf16.mxu0 0
  %454 = vmatpush1.bf16.msra.mxu0 0
  %455 = vmatprep.subr.bf16.mxu0 0
  %456 = vmatpush1.bf16.msra.mxu0 0
  %457 = vmatprep.subr.bf16.mxu0 0
  %458 = vmatpush1.bf16.msra.mxu0 0
  %459 = vmatprep.subr.bf16.mxu0 0
  %460 = vmatpush1.bf16.msra.mxu0 0
  %461 = vmatprep.subr.bf16.mxu0 0
  %462 = vmatpush1.bf16.msra.mxu0 0
  %463 = vmatprep.subr.bf16.mxu0 0
  %464 = vmatpush1.bf16.msra.mxu0 0
  %465 = vmatprep.subr.bf16.mxu0 0
  %466 = vmatpush1.bf16.msra.mxu0 0
  %467 = vmatprep.subr.bf16.mxu0 0
  %468 = vmatpush1.bf16.msra.mxu0 0
  %469 = vmatprep.mubr.bf16.mxu0 0
  %470 = vmatmul.mubr.bf16.gmra.mrb[0].mxu0 %v435
  %v471 = vpop.f32.mrb[0].mxu0
  %v472 = vadd.f32 %v401, %v471
  %v473 = vpop.f32.mrb[0].mxu0
  %v474 = vpop.f32.mrb[0].mxu0
  %v475 = vadd.f32 %v406, %v474
  %v476 = vpop.f32.mrb[0].mxu0
  %477 = vdwg.mxu0
  %v478 = vmax.f32 %v472, 0.0
  %v479 = vmax.f32 %v475, 0.0
  %v480 = vld [vmem:[%s11] sm:$0xf]
  %v481 = vld [vmem:[%s11 + $0x4] sm:$0xf]
  %v482 = vpack.c.bf16 %v275, %v275
  %v483 = vld [vmem:[%s12] sm:$0xff]
  %v484 = vld [vmem:[%s12 + $0x8] sm:$0xff]
  %486 = vset.pattern.permute.xlu0 0
  %487 = vperm.xlu0 %486, %v483
  %v488 = vpop.permute.xlu0 %487
  %491 = vset.pattern.permute.xlu0 0
  %492 = vperm.xlu0 %491, %v484
  %v493 = vpop.permute.xlu0 %492
  %v497 = vunpack.c.l.b16 %v480
  %v498 = vunpack.c.l.b16 %v481
  %v499 = vpack.c.b16 %v498, %v497
  %v501 = vsel %vm227, %v499, 0
  %v504 = vsel %vm97, %v482, 0
  %506 = vmatprep.subr.bf16.mxu0 0
  %507 = vmatpush1.bf16.msra.mxu0 %v504
  %508 = vmatprep.subr.bf16.mxu0 0
  %509 = vmatpush1.bf16.msra.mxu0 0
  %510 = vmatprep.subr.bf16.mxu0 0
  %511 = vmatpush1.bf16.msra.mxu0 0
  %512 = vmatprep.subr.bf16.mxu0 0
  %513 = vmatpush1.bf16.msra.mxu0 0
  %514 = vmatprep.subr.bf16.mxu0 0
  %515 = vmatpush1.bf16.msra.mxu0 0
  %516 = vmatprep.subr.bf16.mxu0 0
  %517 = vmatpush1.bf16.msra.mxu0 0
  %518 = vmatprep.subr.bf16.mxu0 0
  %519 = vmatpush1.bf16.msra.mxu0 0
  %520 = vmatprep.subr.bf16.mxu0 0
  %521 = vmatpush1.bf16.msra.mxu0 0
  %522 = vmatprep.subr.bf16.mxu0 0
  %523 = vmatpush1.bf16.msra.mxu0 0
  %524 = vmatprep.subr.bf16.mxu0 0
  %525 = vmatpush1.bf16.msra.mxu0 0
  %526 = vmatprep.subr.bf16.mxu0 0
  %527 = vmatpush1.bf16.msra.mxu0 0
  %528 = vmatprep.subr.bf16.mxu0 0
  %529 = vmatpush1.bf16.msra.mxu0 0
  %530 = vmatprep.subr.bf16.mxu0 0
  %531 = vmatpush1.bf16.msra.mxu0 0
  %532 = vmatprep.subr.bf16.mxu0 0
  %533 = vmatpush1.bf16.msra.mxu0 0
  %534 = vmatprep.subr.bf16.mxu0 0
  %535 = vmatpush1.bf16.msra.mxu0 0
  %536 = vmatprep.subr.bf16.mxu0 0
  %537 = vmatpush1.bf16.msra.mxu0 0
  %538 = vmatprep.mubr.bf16.mxu0 0
  %539 = vmatmul.mubr.bf16.gmra.mrb[0].mxu0 %v501
  %v540 = vpop.f32.mrb[0].mxu0
  %v541 = vadd.f32 %v488, %v540
  %v542 = vpop.f32.mrb[0].mxu0
  %v543 = vpop.f32.mrb[0].mxu0
  %v544 = vadd.f32 %v493, %v543
  %v545 = vpop.f32.mrb[0].mxu0
  %546 = vdwg.mxu0
  %v547 = vadd.f32 %v478, %v541
  %v548 = vadd.f32 %v479, %v544
  %v549 = vmax.f32 %v547, 0.0
  %v550 = vmax.f32 %v548, 0.0
  %553 = vrot.lane.b32.xlu0 %v549, 126
  %v554 = vpop.permute.xlu0 %553
  %555 = vrot.lane.b32.xlu0 %v550, 126
  %v556 = vpop.permute.xlu0 %555
  %559 = vrot.lane.b32.xlu0 %v549, 124
  %v560 = vpop.permute.xlu0 %559
  %561 = vrot.lane.b32.xlu0 %v550, 124
  %v562 = vpop.permute.xlu0 %561
  %565 = vrot.lane.b32.xlu0 %v549, 122
  %v566 = vpop.permute.xlu0 %565
  %567 = vrot.lane.b32.xlu0 %v550, 122
  %v568 = vpop.permute.xlu0 %567
  %571 = vrot.lane.b32.xlu0 %v549, 120
  %v572 = vpop.permute.xlu0 %571
  %573 = vrot.lane.b32.xlu0 %v550, 120
  %v574 = vpop.permute.xlu0 %573
  %577 = vrot.lane.b32.xlu0 %v549, 118
  %v578 = vpop.permute.xlu0 %577
  %579 = vrot.lane.b32.xlu0 %v550, 118
  %v580 = vpop.permute.xlu0 %579
  %583 = vrot.lane.b32.xlu0 %v549, 116
  %v584 = vpop.permute.xlu0 %583
  %585 = vrot.lane.b32.xlu0 %v550, 116
  %v586 = vpop.permute.xlu0 %585
  %589 = vrot.lane.b32.xlu0 %v549, 114
  %v590 = vpop.permute.xlu0 %589
  %591 = vrot.lane.b32.xlu0 %v550, 114
  %v592 = vpop.permute.xlu0 %591
  %v595 = vld [vmem:[%s13] sm:$0xf]
  %v596 = vld [vmem:[%s13 + $0x4] sm:$0xf]
  %v597 = vld [vmem:[%s13 + $0x8] sm:$0xf]
  %v598 = vld [vmem:[%s13 + $0xc] sm:$0xf]
  %v599 = vld [vmem:[%s13 + $0x10] sm:$0xf]
  %v600 = vld [vmem:[%s13 + $0x14] sm:$0xf]
  %v601 = vld [vmem:[%s13 + $0x18] sm:$0xf]
  %v602 = vld [vmem:[%s13 + $0x1c] sm:$0xf]
  %v603 = vpack.c.bf16 %v550, %v549
  %v604 = vpack.c.bf16 %v556, %v554
  %v605 = vpack.c.bf16 %v562, %v560
  %v606 = vpack.c.bf16 %v568, %v566
  %v607 = vpack.c.bf16 %v574, %v572
  %v608 = vpack.c.bf16 %v580, %v578
  %v609 = vpack.c.bf16 %v586, %v584
  %v610 = vpack.c.bf16 %v592, %v590
  %v611 = vld [vmem:[%s14] sm:$0xff]
  %v612 = vld [vmem:[%s14 + $0x8] sm:$0xff]
  %v613 = vld [vmem:[%s14 + $0x10] sm:$0xff]
  %v614 = vld [vmem:[%s14 + $0x18] sm:$0xff]
  %v615 = vld [vmem:[%s14 + $0x20] sm:$0xff]
  %v616 = vld [vmem:[%s14 + $0x28] sm:$0xff]
  %v617 = vld [vmem:[%s14 + $0x30] sm:$0xff]
  %v618 = vld [vmem:[%s14 + $0x38] sm:$0xff]
  %620 = vset.pattern.permute.xlu0 0
  %621 = vperm.xlu0 %620, %v611
  %v622 = vpop.permute.xlu0 %621
  %625 = vset.pattern.permute.xlu0 0
  %626 = vperm.xlu0 %625, %v612
  %v627 = vpop.permute.xlu0 %626
  %630 = vset.pattern.permute.xlu0 0
  %631 = vperm.xlu0 %630, %v613
  %v632 = vpop.permute.xlu0 %631
  %635 = vset.pattern.permute.xlu0 0
  %636 = vperm.xlu0 %635, %v614
  %v637 = vpop.permute.xlu0 %636
  %640 = vset.pattern.permute.xlu0 0
  %641 = vperm.xlu0 %640, %v615
  %v642 = vpop.permute.xlu0 %641
  %645 = vset.pattern.permute.xlu0 0
  %646 = vperm.xlu0 %645, %v616
  %v647 = vpop.permute.xlu0 %646
  %650 = vset.pattern.permute.xlu0 0
  %651 = vperm.xlu0 %650, %v617
  %v652 = vpop.permute.xlu0 %651
  %655 = vset.pattern.permute.xlu0 0
  %656 = vperm.xlu0 %655, %v618
  %v657 = vpop.permute.xlu0 %656
  %v667 = vunpack.c.l.b16 %v595
  %v668 = vunpack.c.l.b16 %v596
  %v669 = vunpack.c.l.b16 %v597
  %v670 = vunpack.c.l.b16 %v598
  %v671 = vunpack.c.l.b16 %v599
  %v672 = vunpack.c.l.b16 %v600
  %v673 = vunpack.c.l.b16 %v601
  %v674 = vunpack.c.l.b16 %v602
  %v675 = vpack.c.b16 %v668, %v667
  %v676 = vpack.c.b16 %v670, %v669
  %v677 = vpack.c.b16 %v672, %v671
  %v678 = vpack.c.b16 %v674, %v673
  %683 = vmatprep.subr.bf16.mxu0 0
  %684 = vmatpush1.bf16.msra.mxu0 %v603
  %685 = vmatprep.subr.bf16.mxu0 0
  %686 = vmatpush1.bf16.msra.mxu0 %v604
  %687 = vmatprep.subr.bf16.mxu0 0
  %688 = vmatpush1.bf16.msra.mxu0 %v605
  %689 = vmatprep.subr.bf16.mxu0 0
  %690 = vmatpush1.bf16.msra.mxu0 %v606
  %691 = vmatprep.subr.bf16.mxu0 0
  %692 = vmatpush1.bf16.msra.mxu0 %v607
  %693 = vmatprep.subr.bf16.mxu0 0
  %694 = vmatpush1.bf16.msra.mxu0 %v608
  %695 = vmatprep.subr.bf16.mxu0 0
  %696 = vmatpush1.bf16.msra.mxu0 %v609
  %697 = vmatprep.subr.bf16.mxu0 0
  %698 = vmatpush1.bf16.msra.mxu0 %v610
  %699 = vmatprep.subr.bf16.mxu0 0
  %700 = vmatpush1.bf16.msra.mxu0 0
  %701 = vmatprep.subr.bf16.mxu0 0
  %702 = vmatpush1.bf16.msra.mxu0 0
  %703 = vmatprep.subr.bf16.mxu0 0
  %704 = vmatpush1.bf16.msra.mxu0 0
  %705 = vmatprep.subr.bf16.mxu0 0
  %706 = vmatpush1.bf16.msra.mxu0 0
  %707 = vmatprep.subr.bf16.mxu0 0
  %708 = vmatpush1.bf16.msra.mxu0 0
  %709 = vmatprep.subr.bf16.mxu0 0
  %710 = vmatpush1.bf16.msra.mxu0 0
  %711 = vmatprep.subr.bf16.mxu0 0
  %712 = vmatpush1.bf16.msra.mxu0 0
  %713 = vmatprep.subr.bf16.mxu0 0
  %714 = vmatpush1.bf16.msra.mxu0 0
  %715 = vmatprep.mubr.bf16.mxu0 0
  %716 = vmatmul.mubr.bf16.gmra.mrb[0].mxu0 %v675
  %v717 = vpop.f32.mrb[0].mxu0
  %v718 = vadd.f32 %v622, %v717
  %v719 = vpop.f32.mrb[0].mxu0
  %v720 = vpop.f32.mrb[0].mxu0
  %v721 = vadd.f32 %v627, %v720
  %v722 = vpop.f32.mrb[0].mxu0
  %723 = vmatprep.mubr.bf16.mxu0 0
  %724 = vmatmul.mubr.bf16.gmra.mrb[0].mxu0 %v676
  %v725 = vpop.f32.mrb[0].mxu0
  %v726 = vadd.f32 %v632, %v725
  %v727 = vpop.f32.mrb[0].mxu0
  %v728 = vpop.f32.mrb[0].mxu0
  %v729 = vadd.f32 %v637, %v728
  %v730 = vpop.f32.mrb[0].mxu0
  %731 = vmatprep.mubr.bf16.mxu0 0
  %732 = vmatmul.mubr.bf16.gmra.mrb[0].mxu0 %v677
  %v733 = vpop.f32.mrb[0].mxu0
  %v734 = vadd.f32 %v642, %v733
  %v735 = vpop.f32.mrb[0].mxu0
  %v736 = vpop.f32.mrb[0].mxu0
  %v737 = vadd.f32 %v647, %v736
  %v738 = vpop.f32.mrb[0].mxu0
  %739 = vmatprep.mubr.bf16.mxu0 0
  %740 = vmatmul.mubr.bf16.gmra.mrb[0].mxu0 %v678
  %v741 = vpop.f32.mrb[0].mxu0
  %v742 = vadd.f32 %v652, %v741
  %v743 = vpop.f32.mrb[0].mxu0
  %v744 = vpop.f32.mrb[0].mxu0
  %v745 = vadd.f32 %v657, %v744
  %v746 = vpop.f32.mrb[0].mxu0
  %747 = vdwg.mxu0
  %v748 = vmax.f32 %v718, 0.0
  %v749 = vmax.f32 %v721, 0.0
  %v750 = vmax.f32 %v726, 0.0
  %v751 = vmax.f32 %v729, 0.0
  %v752 = vmax.f32 %v734, 0.0
  %v753 = vmax.f32 %v737, 0.0
  %v754 = vmax.f32 %v742, 0.0
  %v755 = vmax.f32 %v745, 0.0
  %v756 = vld [vmem:[%s15] sm:$0xf]
  %v757 = vpack.c.bf16 %v749, %v748
  %v758 = vpack.c.bf16 %v751, %v750
  %v759 = vpack.c.bf16 %v753, %v752
  %v760 = vpack.c.bf16 %v755, %v754
  %v761 = vld [vmem:[%s16] sm:$0xff]
  %763 = vset.pattern.permute.xlu0 0
  %764 = vperm.xlu0 %763, %v761
  %v765 = vpop.permute.xlu0 %764
  %vm767 = vcmask 523264
  %v769 = vsel %vm767, %v756, 0
  %771 = vmatprep.subr.bf16.mxu0 0
  %772 = vmatpush1.bf16.msra.mxu0 %v757
  %773 = vmatprep.subr.bf16.mxu0 0
  %774 = vmatpush1.bf16.msra.mxu0 %v758
  %775 = vmatprep.subr.bf16.mxu0 0
  %776 = vmatpush1.bf16.msra.mxu0 %v759
  %777 = vmatprep.subr.bf16.mxu0 0
  %778 = vmatpush1.bf16.msra.mxu0 %v760
  %779 = vmatprep.subr.bf16.mxu0 0
  %780 = vmatpush1.bf16.msra.mxu0 0
  %781 = vmatprep.subr.bf16.mxu0 0
  %782 = vmatpush1.bf16.msra.mxu0 0
  %783 = vmatprep.subr.bf16.mxu0 0
  %784 = vmatpush1.bf16.msra.mxu0 0
  %785 = vmatprep.subr.bf16.mxu0 0
  %786 = vmatpush1.bf16.msra.mxu0 0
  %787 = vmatprep.subr.bf16.mxu0 0
  %788 = vmatpush1.bf16.msra.mxu0 0
  %789 = vmatprep.subr.bf16.mxu0 0
  %790 = vmatpush1.bf16.msra.mxu0 0
  %791 = vmatprep.subr.bf16.mxu0 0
  %792 = vmatpush1.bf16.msra.mxu0 0
  %793 = vmatprep.subr.bf16.mxu0 0
  %794 = vmatpush1.bf16.msra.mxu0 0
  %795 = vmatprep.subr.bf16.mxu0 0
  %796 = vmatpush1.bf16.msra.mxu0 0
  %797 = vmatprep.subr.bf16.mxu0 0
  %798 = vmatpush1.bf16.msra.mxu0 0
  %799 = vmatprep.subr.bf16.mxu0 0
  %800 = vmatpush1.bf16.msra.mxu0 0
  %801 = vmatprep.subr.bf16.mxu0 0
  %802 = vmatpush1.bf16.msra.mxu0 0
  %803 = vmatprep.mubr.bf16.mxu0 0
  %804 = vmatmul.mubr.bf16.gmra.mrb[0].mxu0 %v769
  %v805 = vpop.f32.mrb[0].mxu0
  %v806 = vadd.f32 %v765, %v805
  %v807 = vpop.f32.mrb[0].mxu0
  %v808 = vpop.f32.mrb[0].mxu0
  %v809 = vpop.f32.mrb[0].mxu0
  %810 = vdwg.mxu0
  %vm811 = vcmask 15360
  %812 = vst.msk [vmem:[%s17] sm:$0xff] %vm811, %v806
  // Predicated region
  $region70: #{tpu_custom_call.1} parent=0 // pred_check
    _
  $region71: #{tpu_custom_call.1} parent=0 // pred_check_branch
    %814 = sbr.rel (0) target = $region73
  $region72: #{tpu_custom_call.1} parent=0 // pred_region
    _
  $region73: #{tpu_custom_call.1} parent=0 // pred_fallthru
    _
  // Predicated region
  $region74: #{tpu_custom_call.1} parent=0 // pred_check
    _
  $region75: #{tpu_custom_call.1} parent=0 // pred_check_branch
    %816 = sbr.rel (0) target = $region77
  $region76: #{tpu_custom_call.1} parent=0 // pred_region
    _
  $region77: #{tpu_custom_call.1} parent=0 // pred_fallthru
    _

</llo_original>
